<compile_context>
chip_gen: v5e
topology: v5e:2x2
jax: 0.10.0
libtpu: 0.0.40
codegen_flags: <defaults>
</compile_context>

<pallas_src>
import jax
import jax.numpy as jnp
from jax.experimental import pallas as pl
from jax.experimental.pallas import tpu as pltpu


def policy_kernel(x_ref, wpack_ref, w2d_ref, b2d_ref, o_ref):
    # x_ref    : (8, TM)    rows 0-3 = states^T, row 4 = ones (bias), rows 5-7 = 0
    # wpack_ref: (128, 8)   cols 0-3 = W1, col 4 = b1, cols 5-7 = 0   (resident)
    # w2d_ref  : (1, 128)   W2[0] - W2[1]                             (resident)
    # b2d_ref  : (1,) SMEM  b2[0] - b2[1]
    # o_ref    : (2, TM)    row 0 = P(action 0), row 1 = P(action 1)

    # fc1 + bias in one MXU matmul (bias fused via the ones-row / b1-column).
    hT = jnp.dot(wpack_ref[...], x_ref[...],
                 preferred_element_type=jnp.float32)          # (128, TM)
    hT = jnp.maximum(hT, 0.0)                                 # ReLU on VPU

    # fc2 as the logit difference on the MXU: d = h . (W2[0]-W2[1]) + (b2[0]-b2[1]).
    d = jnp.dot(w2d_ref[...], hT,
                preferred_element_type=jnp.float32) + b2d_ref[0]   # (1, TM)

    # softmax([l0, l1])[0] == sigmoid(l0 - l1); exact, numerically safe.
    p0 = 1.0 / (1.0 + jnp.exp(-d))                            # (1, TM)

    # One coalesced, lane-dense store for the whole output tile.
    o_ref[...] = jnp.concatenate([p0, 1.0 - p0], axis=0)      # (2, TM)


def prepare_params(w1, b1, w2, b2):
    """Pack torch-layout params ONCE into kernel layout (hoisted off hot path).

    w1: (128, 4), b1: (128,), w2: (2, 128), b2: (2,)
      -> ((128, 8) f32 wpack, (1, 128) f32 w2diff, (1,) f32 b2diff)
    """
    wpack = jnp.zeros((128, 8), jnp.float32)
    wpack = wpack.at[:, 0:4].set(w1.astype(jnp.float32))
    wpack = wpack.at[:, 4].set(b1.astype(jnp.float32))
    w2d = (w2[0] - w2[1]).astype(jnp.float32).reshape(1, 128)
    b2d = (b2[0] - b2[1]).astype(jnp.float32).reshape(1)
    return wpack, w2d, b2d


def policy_forward(x, params):
    """x: (4,) single state or (M, 4) stacked states. Returns (2,) or (M, 2) probs."""
    wpack, w2d, b2d = params

    if x.ndim == 1:
        # Single state: a pallas launch is pure dispatch/DMA overhead for
        # nanoseconds of compute -- let XLA fuse it.
        xf = x.astype(jnp.float32)
        h = jnp.maximum(wpack[:, 0:4] @ xf + wpack[:, 4], 0.0)
        d = jnp.dot(w2d[0], h) + b2d[0]
        p0 = 1.0 / (1.0 + jnp.exp(-d))
        return jnp.stack([p0, 1.0 - p0])

    x2d = x.astype(jnp.float32)                      # (M, 4)
    M = x2d.shape[0]

    # Lane-dense tiling: batch rides the lane axis, so TM is a multiple of 128,
    # capped at 2048.  Tile count is balanced so padding stays small and large
    # batches produce >= 2 grid steps (lets v7x shard across its two TCs).
    TM_MAX = 2048
    ntiles = pl.cdiv(M, TM_MAX)
    TM = 128 * pl.cdiv(pl.cdiv(M, ntiles), 128)
    Mp = ntiles * TM

    # Augmented, transposed state block: rows 0-3 = x^T, row 4 = ones (fused
    # bias), rows 5-7 = 0.  Padded batch columns produce finite probabilities
    # (relu(b1)-derived) and are sliced off below.
    x_aug = jnp.zeros((8, Mp), jnp.float32)
    x_aug = x_aug.at[0:4, :M].set(x2d.T)
    x_aug = x_aug.at[4, :].set(1.0)

    out = pl.pallas_call(
        policy_kernel,
        out_shape=jax.ShapeDtypeStruct((2, Mp), jnp.float32),
        grid=(ntiles,),
        in_specs=[
            pl.BlockSpec((8, TM), lambda i: (0, i)),             # states tile (lane-dense)
            pl.BlockSpec((128, 8), lambda i: (0, 0)),            # packed W1|b1 (resident)
            pl.BlockSpec((1, 128), lambda i: (0, 0)),            # W2 row diff (resident)
            pl.BlockSpec(memory_space=pltpu.MemorySpace.SMEM),   # b2 diff scalar
        ],
        out_specs=pl.BlockSpec((2, TM), lambda i: (0, i)),       # lane-dense output
        compiler_params=pltpu.CompilerParams(
            dimension_semantics=("parallel",),
        ),
    )(x_aug, wpack, w2d, b2d)

    return out[:, :M].T                               # (M, 2)


def init_params(key):
    """Deterministic init mimicking nn.Linear's U(-1/sqrt(fan_in), 1/sqrt(fan_in))."""
    k1, k2, k3, k4 = jax.random.split(key, 4)
    lim1 = 1.0 / jnp.sqrt(4.0)
    lim2 = 1.0 / jnp.sqrt(128.0)
    w1 = jax.random.uniform(k1, (128, 4), jnp.float32, -lim1, lim1)   # torch layout (out, in)
    b1 = jax.random.uniform(k2, (128,), jnp.float32, -lim1, lim1)
    w2 = jax.random.uniform(k3, (2, 128), jnp.float32, -lim2, lim2)
    b2 = jax.random.uniform(k4, (2,), jnp.float32, -lim2, lim2)
    return w1, b1, w2, b2


def _reference(x, w1, b1, w2, b2):
    # Per-state softmax over the 2 actions (== torch softmax(dim=0) applied to
    # each single-state 1-D (2,) output).
    h = jnp.maximum(x @ w1.T + b1, 0.0)
    return jax.nn.softmax(h @ w2.T + b2, axis=-1)


if __name__ == "__main__":
    key = jax.random.PRNGKey(0)
    kx, kx2, kp = jax.random.split(key, 3)

    w1, b1, w2, b2 = init_params(kp)
    params = prepare_params(w1, b1, w2, b2)
    fwd = jax.jit(policy_forward)

    # Small stacked rollout of CartPole-like states: (T, 4); single grid step.
    T = 256
    x = jax.random.normal(kx, (T, 4), jnp.float32)
    probs = jax.block_until_ready(fwd(x, params))
    probs_ref = _reference(x, w1, b1, w2, b2)
    assert probs.shape == (T, 2)
    assert jnp.allclose(probs, probs_ref, atol=1e-5), (probs[:2], probs_ref[:2])
    assert jnp.allclose(jnp.sum(probs, axis=-1), 1.0, atol=1e-6)

    # Larger ragged batch: exercises multi-tile grid + lane padding.
    T2 = 2500
    x_big = jax.random.normal(kx2, (T2, 4), jnp.float32)
    probs_big = jax.block_until_ready(fwd(x_big, params))
    probs_big_ref = _reference(x_big, w1, b1, w2, b2)
    assert probs_big.shape == (T2, 2)
    assert jnp.allclose(probs_big, probs_big_ref, atol=1e-5)
    assert jnp.allclose(jnp.sum(probs_big, axis=-1), 1.0, atol=1e-6)

    # Original single-state call path: x of shape (4,) (plain-JAX fast path).
    p1 = jax.block_until_ready(fwd(x[0], params))
    assert p1.shape == (2,)
    assert jnp.allclose(p1, probs_ref[0], atol=1e-5), (p1, probs_ref[0])

    print("KERNEL_OK")
</pallas_src>

<mosaic_0001>
module attributes {stable_mosaic.version = 11 : i64} {
  func.func @policy_kernel(%arg0: i32, %arg1: memref<8x256xf32, #tpu.memory_space<vmem>>, %arg2: memref<128x8xf32, #tpu.memory_space<vmem>>, %arg3: memref<1x128xf32, #tpu.memory_space<vmem>>, %arg4: memref<1xf32, #tpu.memory_space<smem>>, %arg5: memref<2x256xf32, #tpu.memory_space<vmem>>) attributes {dimension_semantics = [#tpu.dimension_semantics<parallel>], iteration_bounds = array<i64: 1>, scalar_prefetch = 0 : i64, scratch_operands = 0 : i64, tpu.core_type = #tpu.core_type<tc>, window_params = [{transform_indices = @transform_0, window_bounds = array<i64: 8, 256>}, {pipeline_mode = #tpu.pipeline_mode<synchronous>, transform_indices = @transform_1, window_bounds = array<i64: 128, 8>}, {pipeline_mode = #tpu.pipeline_mode<synchronous>, transform_indices = @transform_2, window_bounds = array<i64: 1, 128>}, {transform_indices = @transform_3, window_bounds = array<i64: 1>}, {transform_indices = @transform_4, window_bounds = array<i64: 2, 256>}]} {
    %c0 = arith.constant 0 : index
    %c0_0 = arith.constant 0 : index
    %0 = vector.load %arg2[%c0, %c0_0] : memref<128x8xf32, #tpu.memory_space<vmem>>, vector<128x8xf32>
    %c0_1 = arith.constant 0 : index
    %c0_2 = arith.constant 0 : index
    %1 = vector.load %arg1[%c0_1, %c0_2] : memref<8x256xf32, #tpu.memory_space<vmem>>, vector<8x256xf32>
    %cst = arith.constant dense<0.000000e+00> : vector<128x256xf32>
    %2 = tpu.matmul %0, %1, %cst {dimension_numbers = #tpu.dot_dimension_numbers<[1], [0], [0], [1], [0, 0, 1, 1], [], []>} : vector<128x8xf32>, vector<8x256xf32>, vector<128x256xf32> -> vector<128x256xf32>
    %cst_3 = arith.constant 0.000000e+00 : f32
    %3 = vector.broadcast %cst_3 : f32 to vector<128x256xf32>
    %4 = arith.maximumf %2, %3 : vector<128x256xf32>
    %c0_4 = arith.constant 0 : index
    %c0_5 = arith.constant 0 : index
    %5 = vector.load %arg3[%c0_4, %c0_5] : memref<1x128xf32, #tpu.memory_space<vmem>>, vector<1x128xf32>
    %cst_6 = arith.constant dense<0.000000e+00> : vector<1x256xf32>
    %6 = tpu.matmul %5, %4, %cst_6 {dimension_numbers = #tpu.dot_dimension_numbers<[1], [0], [0], [1], [0, 0, 1, 1], [], []>} : vector<1x128xf32>, vector<128x256xf32>, vector<1x256xf32> -> vector<1x256xf32>
    %c0_7 = arith.constant 0 : index
    %7 = memref.load %arg4[%c0_7] : memref<1xf32, #tpu.memory_space<smem>>
    %8 = vector.broadcast %7 : f32 to vector<1x256xf32>
    %9 = arith.addf %6, %8 : vector<1x256xf32>
    %cst_8 = arith.constant 0.000000e+00 : f32
    %10 = vector.broadcast %cst_8 : f32 to vector<1x256xf32>
    %11 = arith.subf %10, %9 : vector<1x256xf32>
    %12 = math.exp %11 : vector<1x256xf32>
    %cst_9 = arith.constant 1.000000e+00 : f32
    %13 = vector.broadcast %cst_9 : f32 to vector<1x256xf32>
    %14 = arith.addf %13, %12 : vector<1x256xf32>
    %cst_10 = arith.constant 1.000000e+00 : f32
    %15 = vector.broadcast %cst_10 : f32 to vector<1x256xf32>
    %16 = arith.divf %15, %14 : vector<1x256xf32>
    %cst_11 = arith.constant 1.000000e+00 : f32
    %17 = vector.broadcast %cst_11 : f32 to vector<1x256xf32>
    %18 = arith.subf %17, %16 : vector<1x256xf32>
    %19 = tpu.concatenate %16, %18 in 0 : vector<1x256xf32>, vector<1x256xf32> -> vector<2x256xf32>
    %c0_12 = arith.constant 0 : index
    %c0_13 = arith.constant 0 : index
    %20 = vector.load %arg5[%c0_12, %c0_13] : memref<2x256xf32, #tpu.memory_space<vmem>>, vector<2x256xf32>
    tpu.vector_store %arg5[%c0_12, %c0_13], %19 {strides = array<i32>} : memref<2x256xf32, #tpu.memory_space<vmem>>, vector<2x256xf32>,
    return
  }
  func.func @transform_0(%arg0: i32) -> (i32, i32) {
    %c0_i32 = arith.constant 0 : i32
    %c0_i32_0 = arith.constant 0 : i32
    return %c0_i32, %arg0 : i32, i32
  }
  func.func @transform_1(%arg0: i32) -> (i32, i32) {
    %c0_i32 = arith.constant 0 : i32
    %c0_i32_0 = arith.constant 0 : i32
    %c0_i32_1 = arith.constant 0 : i32
    return %c0_i32, %c0_i32_0 : i32, i32
  }
  func.func @transform_2(%arg0: i32) -> (i32, i32) {
    %c0_i32 = arith.constant 0 : i32
    %c0_i32_0 = arith.constant 0 : i32
    %c0_i32_1 = arith.constant 0 : i32
    return %c0_i32, %c0_i32_0 : i32, i32
  }
  func.func @transform_3(%arg0: i32) -> i32 {
    %c0_i32 = arith.constant 0 : i32
    %c0_i32_0 = arith.constant 0 : i32
    return %c0_i32 : i32
  }
  func.func @transform_4(%arg0: i32) -> (i32, i32) {
    %c0_i32 = arith.constant 0 : i32
    %c0_i32_0 = arith.constant 0 : i32
    return %c0_i32, %arg0 : i32, i32
  }
}

</mosaic_0001>

<llo_original>
// kernel: policy_forward.1
$region0: #{policy_forward.1}
  #allocation0 [shape = 'u32[]', space=smem, size = 0x4, offset = 0x4, fixed_abs, tag = 'smem constant byte address 0x4 - core index']
  #allocation1 [shape = 'u32[72,128]{1,0:T(1,128)}', space=vmem, size = 0x9000, scoped, tag = 'internal scratch']
  #allocation2 [shape = 'f32[1]{0:T(128)S(6)}', space=smem, size = 0x200, scoped, tag = 'scoped memory for policy_forward.1']
  %s0 = inlined_call_operand.vmem [shape: f32[8,256], index: 0, kind: input, shape index: {}]
  %s1 = inlined_call_operand.vmem [shape: f32[128,8], index: 1, kind: input, shape index: {}]
  %s2 = inlined_call_operand.vmem [shape: f32[1,128], index: 2, kind: input, shape index: {}]
  %s3 = inlined_call_operand.<no memory space> [shape: f32[1], index: 3, kind: input, shape index: {}]
  %s4 = inlined_call_operand.hbm [shape: f32[2,256], index: 4, kind: output, shape index: {}]
  %s5 = sld [smem:[#allocation0]]
  $region26: #{policy_forward.1} parent=0
    _
  %s7 = ssub.s32 1, %s5
  %s8 = scalar_select 0, %s7, %s5
  %9 = sst [smem:[#allocation2]] %s3
  $region1: #{policy_forward.1} parent=0
    #allocation3 [shape = 'u8[2048]{0}', space=vmem, size = 0x800, scoped, tag = 'output window, operand 0, single buffered']
    #allocation4 [shape = 's32[1]{0}', space=sflag, size = 0x4, scoped, tag = 'scoped memory for policy_forward.1']
    %10 = vsyncpa [#allocation4], 0
    // Predicated region
    $region2: #{policy_forward.1} parent=1 // pred_check
      _
    $region3: #{policy_forward.1} parent=1 // pred_check_branch
      %12 = sbr.rel (0) target = $region5
    $region4: #{policy_forward.1} parent=1 // pred_region
      _
    $region5: #{policy_forward.1} parent=1 // pred_fallthru
      _
    // Predicated region
    $region6: #{policy_forward.1} parent=1 // pred_check
      _
    $region7: #{policy_forward.1} parent=1 // pred_check_branch
      %14 = sbr.rel (0) target = $region9
    $region8: #{policy_forward.1} parent=1 // pred_region
      _
    $region9: #{policy_forward.1} parent=1 // pred_fallthru
      _
    // Predicated region
    $region10: #{policy_forward.1} parent=1 // pred_check
      _
    $region11: #{policy_forward.1} parent=1 // pred_check_branch
      %16 = sbr.rel (0) target = $region13
    $region12: #{policy_forward.1} parent=1 // pred_region
      _
    $region13: #{policy_forward.1} parent=1 // pred_fallthru
      _
    // Predicated region
    $region14: #{policy_forward.1} parent=1 // pred_check
      _
    $region15: #{policy_forward.1} parent=1 // pred_check_branch
      %18 = sbr.rel (0) target = $region17
    $region16: #{policy_forward.1} parent=1 // pred_region
      _
    $region17: #{policy_forward.1} parent=1 // pred_fallthru
      _
    %v19 = vld [vmem:[%s1] sm:$0xff]
    %v20 = vld [vmem:[%s1 + $0x8] sm:$0xff]
    %v21 = vld [vmem:[%s1 + $0x10] sm:$0xff]
    %v22 = vld [vmem:[%s1 + $0x18] sm:$0xff]
    %v23 = vld [vmem:[%s1 + $0x20] sm:$0xff]
    %v24 = vld [vmem:[%s1 + $0x28] sm:$0xff]
    %v25 = vld [vmem:[%s1 + $0x30] sm:$0xff]
    %v26 = vld [vmem:[%s1 + $0x38] sm:$0xff]
    %v27 = vld [vmem:[%s1 + $0x40] sm:$0xff]
    %v28 = vld [vmem:[%s1 + $0x48] sm:$0xff]
    %v29 = vld [vmem:[%s1 + $0x50] sm:$0xff]
    %v30 = vld [vmem:[%s1 + $0x58] sm:$0xff]
    %v31 = vld [vmem:[%s1 + $0x60] sm:$0xff]
    %v32 = vld [vmem:[%s1 + $0x68] sm:$0xff]
    %v33 = vld [vmem:[%s1 + $0x70] sm:$0xff]
    %v34 = vld [vmem:[%s1 + $0x78] sm:$0xff]
    %v35 = vld [vmem:[%s0] sm:$0xff]
    %v36 = vld [vmem:[%s0 + $0x8] sm:$0xff]
    %vm37 = vcmask 64512
    %v39 = vsel %vm37, %v19, 0
    %v42 = vsel %vm37, %v20, 0
    %v45 = vsel %vm37, %v21, 0
    %v48 = vsel %vm37, %v22, 0
    %v51 = vsel %vm37, %v23, 0
    %v54 = vsel %vm37, %v24, 0
    %v57 = vsel %vm37, %v25, 0
    %v60 = vsel %vm37, %v26, 0
    %v63 = vsel %vm37, %v27, 0
    %v66 = vsel %vm37, %v28, 0
    %v69 = vsel %vm37, %v29, 0
    %v72 = vsel %vm37, %v30, 0
    %v75 = vsel %vm37, %v31, 0
    %v78 = vsel %vm37, %v32, 0
    %v81 = vsel %vm37, %v33, 0
    %v84 = vsel %vm37, %v34, 0
    %86 = vmatpush.msra.mxu0 0.0
    %87 = vmatpush.msra.mxu0 0.0
    %88 = vmatpush.msra.mxu0 0.0
    %89 = vmatpush.msra.mxu0 0.0
    %90 = vmatpush.msra.mxu0 0.0
    %91 = vmatpush.msra.mxu0 0.0
    %92 = vmatpush.msra.mxu0 0.0
    %93 = vmatpush.msra.mxu0 0.0
    %94 = vmatpush.msra.mxu0 0.0
    %95 = vmatpush.msra.mxu0 0.0
    %96 = vmatpush.msra.mxu0 0.0
    %97 = vmatpush.msra.mxu0 0.0
    %98 = vmatpush.msra.mxu0 0.0
    %99 = vmatpush.msra.mxu0 0.0
    %100 = vmatpush.msra.mxu0 0.0
    %101 = vmatpush.msra.mxu0 %v35
    %102 = vmatmul.f32.gmra.mxu0 %v39
    %v103 = vpop.f32.mrf.mxu0
    %v104 = vadd.f32 0.0, %v103
    %105 = vmatmul.f32.gmra.mxu0 %v42
    %v106 = vpop.f32.mrf.mxu0
    %v107 = vadd.f32 0.0, %v106
    %108 = vmatmul.f32.gmra.mxu0 %v45
    %v109 = vpop.f32.mrf.mxu0
    %v110 = vadd.f32 0.0, %v109
    %111 = vmatmul.f32.gmra.mxu0 %v48
    %v112 = vpop.f32.mrf.mxu0
    %v113 = vadd.f32 0.0, %v112
    %114 = vmatmul.f32.gmra.mxu0 %v51
    %v115 = vpop.f32.mrf.mxu0
    %v116 = vadd.f32 0.0, %v115
    %117 = vmatmul.f32.gmra.mxu0 %v54
    %v118 = vpop.f32.mrf.mxu0
    %v119 = vadd.f32 0.0, %v118
    %120 = vmatmul.f32.gmra.mxu0 %v57
    %v121 = vpop.f32.mrf.mxu0
    %v122 = vadd.f32 0.0, %v121
    %123 = vmatmul.f32.gmra.mxu0 %v60
    %v124 = vpop.f32.mrf.mxu0
    %v125 = vadd.f32 0.0, %v124
    %126 = vmatmul.f32.gmra.mxu0 %v63
    %v127 = vpop.f32.mrf.mxu0
    %v128 = vadd.f32 0.0, %v127
    %129 = vmatmul.f32.gmra.mxu0 %v66
    %v130 = vpop.f32.mrf.mxu0
    %v131 = vadd.f32 0.0, %v130
    %132 = vmatmul.f32.gmra.mxu0 %v69
    %v133 = vpop.f32.mrf.mxu0
    %v134 = vadd.f32 0.0, %v133
    %135 = vmatmul.f32.gmra.mxu0 %v72
    %v136 = vpop.f32.mrf.mxu0
    %v137 = vadd.f32 0.0, %v136
    %138 = vmatmul.f32.gmra.mxu0 %v75
    %v139 = vpop.f32.mrf.mxu0
    %v140 = vadd.f32 0.0, %v139
    %141 = vmatmul.f32.gmra.mxu0 %v78
    %v142 = vpop.f32.mrf.mxu0
    %v143 = vadd.f32 0.0, %v142
    %144 = vmatmul.f32.gmra.mxu0 %v81
    %v145 = vpop.f32.mrf.mxu0
    %v146 = vadd.f32 0.0, %v145
    %147 = vmatmul.f32.gmra.mxu0 %v84
    %v148 = vpop.f32.mrf.mxu0
    %v149 = vadd.f32 0.0, %v148
    %150 = vdwg.mxu0
    %151 = vmatpush.msra.mxu0 0.0
    %152 = vmatpush.msra.mxu0 0.0
    %153 = vmatpush.msra.mxu0 0.0
    %154 = vmatpush.msra.mxu0 0.0
    %155 = vmatpush.msra.mxu0 0.0
    %156 = vmatpush.msra.mxu0 0.0
    %157 = vmatpush.msra.mxu0 0.0
    %158 = vmatpush.msra.mxu0 0.0
    %159 = vmatpush.msra.mxu0 0.0
    %160 = vmatpush.msra.mxu0 0.0
    %161 = vmatpush.msra.mxu0 0.0
    %162 = vmatpush.msra.mxu0 0.0
    %163 = vmatpush.msra.mxu0 0.0
    %164 = vmatpush.msra.mxu0 0.0
    %165 = vmatpush.msra.mxu0 0.0
    %166 = vmatpush.msra.mxu0 %v36
    %167 = vmatmul.f32.gmra.mxu0 %v39
    %v168 = vpop.f32.mrf.mxu0
    %v169 = vadd.f32 0.0, %v168
    %170 = vmatmul.f32.gmra.mxu0 %v42
    %v171 = vpop.f32.mrf.mxu0
    %v172 = vadd.f32 0.0, %v171
    %173 = vmatmul.f32.gmra.mxu0 %v45
    %v174 = vpop.f32.mrf.mxu0
    %v175 = vadd.f32 0.0, %v174
    %176 = vmatmul.f32.gmra.mxu0 %v48
    %v177 = vpop.f32.mrf.mxu0
    %v178 = vadd.f32 0.0, %v177
    %179 = vmatmul.f32.gmra.mxu0 %v51
    %v180 = vpop.f32.mrf.mxu0
    %v181 = vadd.f32 0.0, %v180
    %182 = vmatmul.f32.gmra.mxu0 %v54
    %v183 = vpop.f32.mrf.mxu0
    %v184 = vadd.f32 0.0, %v183
    %185 = vmatmul.f32.gmra.mxu0 %v57
    %v186 = vpop.f32.mrf.mxu0
    %v187 = vadd.f32 0.0, %v186
    %188 = vmatmul.f32.gmra.mxu0 %v60
    %v189 = vpop.f32.mrf.mxu0
    %v190 = vadd.f32 0.0, %v189
    %191 = vmatmul.f32.gmra.mxu0 %v63
    %v192 = vpop.f32.mrf.mxu0
    %v193 = vadd.f32 0.0, %v192
    %194 = vmatmul.f32.gmra.mxu0 %v66
    %v195 = vpop.f32.mrf.mxu0
    %v196 = vadd.f32 0.0, %v195
    %197 = vmatmul.f32.gmra.mxu0 %v69
    %v198 = vpop.f32.mrf.mxu0
    %v199 = vadd.f32 0.0, %v198
    %200 = vmatmul.f32.gmra.mxu0 %v72
    %v201 = vpop.f32.mrf.mxu0
    %v202 = vadd.f32 0.0, %v201
    %203 = vmatmul.f32.gmra.mxu0 %v75
    %v204 = vpop.f32.mrf.mxu0
    %v205 = vadd.f32 0.0, %v204
    %206 = vmatmul.f32.gmra.mxu0 %v78
    %v207 = vpop.f32.mrf.mxu0
    %v208 = vadd.f32 0.0, %v207
    %209 = vmatmul.f32.gmra.mxu0 %v81
    %v210 = vpop.f32.mrf.mxu0
    %v211 = vadd.f32 0.0, %v210
    %212 = vmatmul.f32.gmra.mxu0 %v84
    %v213 = vpop.f32.mrf.mxu0
    %v214 = vadd.f32 0.0, %v213
    %215 = vdwg.mxu0
    %v216 = vmax.f32 %v104, 0.0
    %v217 = vmax.f32 %v169, 0.0
    %v218 = vmax.f32 %v107, 0.0
    %v219 = vmax.f32 %v172, 0.0
    %v220 = vmax.f32 %v110, 0.0
    %v221 = vmax.f32 %v175, 0.0
    %v222 = vmax.f32 %v113, 0.0
    %v223 = vmax.f32 %v178, 0.0
    %v224 = vmax.f32 %v116, 0.0
    %v225 = vmax.f32 %v181, 0.0
    %v226 = vmax.f32 %v119, 0.0
    %v227 = vmax.f32 %v184, 0.0
    %v228 = vmax.f32 %v122, 0.0
    %v229 = vmax.f32 %v187, 0.0
    %v230 = vmax.f32 %v125, 0.0
    %v231 = vmax.f32 %v190, 0.0
    %v232 = vmax.f32 %v128, 0.0
    %v233 = vmax.f32 %v193, 0.0
    %v234 = vmax.f32 %v131, 0.0
    %v235 = vmax.f32 %v196, 0.0
    %v236 = vmax.f32 %v134, 0.0
    %v237 = vmax.f32 %v199, 0.0
    %v238 = vmax.f32 %v137, 0.0
    %v239 = vmax.f32 %v202, 0.0
    %v240 = vmax.f32 %v140, 0.0
    %v241 = vmax.f32 %v205, 0.0
    %v242 = vmax.f32 %v143, 0.0
    %v243 = vmax.f32 %v208, 0.0
    %v244 = vmax.f32 %v146, 0.0
    %v245 = vmax.f32 %v211, 0.0
    %v246 = vmax.f32 %v149, 0.0
    %v247 = vmax.f32 %v214, 0.0
    %v248 = vld [vmem:[%s2] sm:$0x1]
    %s249 = sld [smem:[#allocation2]]
    %v250 = vstv %s249
    %251 = vmatpush.msra.mxu0 %v246
    %252 = vmatpush.msra.mxu0 %v244
    %253 = vmatpush.msra.mxu0 %v242
    %254 = vmatpush.msra.mxu0 %v240
    %255 = vmatpush.msra.mxu0 %v238
    %256 = vmatpush.msra.mxu0 %v236
    %257 = vmatpush.msra.mxu0 %v234
    %258 = vmatpush.msra.mxu0 %v232
    %259 = vmatpush.msra.mxu0 %v230
    %260 = vmatpush.msra.mxu0 %v228
    %261 = vmatpush.msra.mxu0 %v226
    %262 = vmatpush.msra.mxu0 %v224
    %263 = vmatpush.msra.mxu0 %v222
    %264 = vmatpush.msra.mxu0 %v220
    %265 = vmatpush.msra.mxu0 %v218
    %266 = vmatpush.msra.mxu0 %v216
    %267 = vmatmul.f32.gmra.mxu0 %v248
    %v268 = vpop.f32.mrf.mxu0
    %v269 = vadd.f32 %v250, %v268
    %270 = vdwg.mxu0
    %271 = vmatpush.msra.mxu0 %v247
    %272 = vmatpush.msra.mxu0 %v245
    %273 = vmatpush.msra.mxu0 %v243
    %274 = vmatpush.msra.mxu0 %v241
    %275 = vmatpush.msra.mxu0 %v239
    %276 = vmatpush.msra.mxu0 %v237
    %277 = vmatpush.msra.mxu0 %v235
    %278 = vmatpush.msra.mxu0 %v233
    %279 = vmatpush.msra.mxu0 %v231
    %280 = vmatpush.msra.mxu0 %v229
    %281 = vmatpush.msra.mxu0 %v227
    %282 = vmatpush.msra.mxu0 %v225
    %283 = vmatpush.msra.mxu0 %v223
    %284 = vmatpush.msra.mxu0 %v221
    %285 = vmatpush.msra.mxu0 %v219
    %286 = vmatpush.msra.mxu0 %v217
    %287 = vmatmul.f32.gmra.mxu0 %v248
    %v288 = vpop.f32.mrf.mxu0
    %v289 = vadd.f32 %v250, %v288
    %290 = vdwg.mxu0
    %v291 = vsub.f32 0.0, %v269
    %v292 = vsub.f32 0.0, %v289
    %v293 = vmul.f32 %v291, 1.442695
    %v294 = vpow.pop %v293
    %v295 = vmul.f32 %v292, 1.442695
    %v296 = vpow.pop %v295
    %v297 = vadd.f32 %v294, 1.0
    %v298 = vadd.f32 %v296, 1.0
    %v299 = vrcp.pop %v297
    %v300 = vmul.f32 %v297, %v299
    %v301 = vsub.f32 1.0, %v300
    %v302 = vmul.f32 %v299, %v301
    %v303 = vadd.f32 %v299, %v302
    %vm304 = vweird.f32 %v297
    %vm305 = vweird.f32 %v299
    %vm306 = vmor %vm304, %vm305
    %v307 = vsel %vm306, %v299, %v303
    %v308 = vand.u32 2147483647, %v297
    %vm309 = vcmp.eq.f32.partialorder %v308, 8.507059e+37
    %v310 = vand.u32 %v297, 2147483648
    %v311 = vor.u32 1.1754944e-38, %v310
    %v312 = vsel %vm309, %v311, %v307
    %v313 = vmul.f32 1.0, %v312
    %v314 = vrcp.pop %v298
    %v315 = vmul.f32 %v298, %v314
    %v316 = vsub.f32 1.0, %v315
    %v317 = vmul.f32 %v314, %v316
    %v318 = vadd.f32 %v314, %v317
    %vm319 = vweird.f32 %v298
    %vm320 = vweird.f32 %v314
    %vm321 = vmor %vm319, %vm320
    %v322 = vsel %vm321, %v314, %v318
    %v323 = vand.u32 2147483647, %v298
    %vm324 = vcmp.eq.f32.partialorder %v323, 8.507059e+37
    %v325 = vand.u32 %v298, 2147483648
    %v326 = vor.u32 1.1754944e-38, %v325
    %v327 = vsel %vm324, %v326, %v322
    %v328 = vmul.f32 1.0, %v327
    %v329 = vsub.f32 1.0, %v313
    %v330 = vsub.f32 1.0, %v328
    %v333 = vrot.slane %v329, 7
    %v334 = vrot.slane %v330, 7
    %vm337 = vcmask 1040384
    %v338 = vsel %vm337, %v313, %v333
    %v339 = vsel %vm337, %v328, %v334
    %v342 = vrot.slane %v339, 6
    %vm343 = vcmask 1041408
    %v344 = vsel %vm343, %v338, %v342
    %346 = vst [vmem:[#allocation3] sm:$0xf] %v344
    // Predicated region
    $region18: #{policy_forward.1} parent=1 // pred_check
      _
    $region19: #{policy_forward.1} parent=1 // pred_check_branch
      %348 = sbr.rel (0) target = $region21
    $region20: #{policy_forward.1} parent=1 // pred_region
      %350 = vsyncadd [#allocation4], 0
      %s352 = sshll.u32 [#allocation3], 4
      %s353 = int_to_ptr.vmem [resolvable:$true] %s352
      %s354 = sshll.u32 %s4, 4
      %s355 = int_to_ptr.hbm [resolvable:$true] %s354
      %357 = dma.vmem_to_hbm [thread:$0]  %s353, 64, %s355, [#allocation4]
    $region21: #{policy_forward.1} parent=1 // pred_fallthru
      _
    // Predicated region
    $region22: #{policy_forward.1} parent=1 // pred_check
      _
    $region23: #{policy_forward.1} parent=1 // pred_check_branch
      %359 = sbr.rel (0) target = $region25
    $region24: #{policy_forward.1} parent=1 // pred_region
      %361 = dma.done [#allocation4], 64
    $region25: #{policy_forward.1} parent=1 // pred_fallthru
      _
    %362 = vsyncpa [#allocation4], 1

</llo_original>
